<compile_context>
chip_gen: v7x
topology: tpu7x:2x2x1
jax: 0.10.0
libtpu: 0.0.40
codegen_flags: <defaults>
</compile_context>

<pallas_src>
from functools import partial

import numpy as np
import jax
import jax.numpy as jnp
from jax import lax
from jax.experimental import pallas as pl
from jax.experimental.pallas import tpu as pltpu


_MASK_THRESHOLD = 0.005


# ----------------------------------------------------------------------------
# Bilinear interpolation weight matrix (PyTorch align_corners=False semantics)
# ----------------------------------------------------------------------------
def _bilinear_weight_matrix(out_size: int, in_size: int) -> np.ndarray:
    if in_size == out_size:
        return np.eye(out_size, dtype=np.float32)
    w = np.zeros((out_size, in_size), dtype=np.float32)
    scale = in_size / out_size
    for i in range(out_size):
        src = (i + 0.5) * scale - 0.5
        src = max(src, 0.0)                       # PyTorch clamps negative src to 0
        i0 = min(int(np.floor(src)), in_size - 1)
        i1 = min(i0 + 1, in_size - 1)
        lam1 = src - i0
        lam0 = 1.0 - lam1
        w[i, i0] += lam0
        w[i, i1] += lam1
    return w


# ----------------------------------------------------------------------------
# Generation-aware VMEM budget + tile selection
# ----------------------------------------------------------------------------
def _vmem_budget():
    """(block-sizing budget, vmem_limit_bytes) sized for the running chip."""
    cap = 64 * 1024 * 1024                       # conservative default (v7x per-TC VMEM)
    try:
        info = pltpu.get_tpu_info()
        cap = int(getattr(info, "vmem_capacity_bytes", cap) or cap)
    except Exception:
        pass
    limit = min(int(cap * 0.75), 110 * 1024 * 1024)   # ~48 MiB v7x, ~96 MiB v5e/v6e
    budget = int(limit * 0.85)                        # headroom for compiler temporaries
    return budget, limit


def _padded_bytes(rows: int, cols: int, itemsize: int) -> int:
    # VMEM tiles pad the trailing two dims to (8, 128).
    return (-(-rows // 8) * 8) * (-(-cols // 128) * 128) * itemsize


def _choose_tile_n(n, hi, wi, ho, wo, itemsize, budget):
    """Slices per block for the resize kernel (includes f32 intermediates)."""
    in_blk = _padded_bytes(hi, wi, itemsize)
    out_blk = _padded_bytes(ho, wo, itemsize)
    cast_f32 = _padded_bytes(hi, wi, 4) if itemsize != 4 else 0
    tmp_f32 = _padded_bytes(hi, wo, 4)                        # flat-matmul scratch / loop temp
    per_slice = 2 * in_blk + 2 * out_blk + cast_f32 + tmp_f32  # in/out double-buffered
    fixed = 2 * (_padded_bytes(ho, hi, 4) + _padded_bytes(wi, wo, 4)) \
        + _padded_bytes(ho, wo, 4)                             # weights (x2 bufs) + one f32 result
    avail = budget - fixed
    cap = max(1, avail // per_slice) if avail > per_slice else 1
    cap = int(min(cap, n))
    if n >= 8:
        # >= 8 grid steps: pipelining overlap + both v7x TensorCores busy.
        cap = min(cap, max(1, n // 8))
    return max(1, cap)


def _choose_row_tile(ho, b, min_steps=8):
    """Output-row tile (multiple of 8, or full) giving >= min_steps grid steps."""
    target_tiles = max(1, -(-min_steps // max(b, 1)))
    th = -(-ho // target_tiles)
    th = -(-th // 8) * 8
    if th >= ho:
        return ho
    return th


# ----------------------------------------------------------------------------
# Pallas kernels
# ----------------------------------------------------------------------------
def _resize_flat_kernel(img_ref, wr_ref, wct_ref, out_ref, tmp_ref, *, tn, hi):
    # img_ref: [tn*Hi, Wi]   wr_ref: [Ho, Hi]   wct_ref: [Wi, Wo]
    # out_ref: [tn, Ho, Wo]  tmp_ref: [tn*Hi, Wo] f32 scratch
    wr = wr_ref[...]
    # One big MXU matmul for the column interpolation of all tn slices.
    tmp_ref[...] = jnp.dot(img_ref[...].astype(jnp.float32), wct_ref[...],
                           preferred_element_type=jnp.float32)

    # Row interpolation per slice; fori_loop keeps live ranges bounded.
    def body(i, carry):
        r0 = pl.multiple_of(i * hi, hi)          # hi % 8 == 0 on this path
        res = jnp.dot(wr, tmp_ref[pl.ds(r0, hi), :],
                      preferred_element_type=jnp.float32)
        out_ref[i] = res.astype(out_ref.dtype)
        return carry

    lax.fori_loop(0, tn, body, 0)


def _resize_loop_kernel(img_ref, wr_ref, wct_ref, out_ref, *, tn, rows_first):
    # img_ref: [tn, Hi, Wi] -> out_ref: [tn, Ho, Wo]; only leading-dim dynamic
    # indexing (no reshapes, no sub-tile slicing) so it is legal for any Hi/Ho.
    wr = wr_ref[...]
    wct = wct_ref[...]

    def one(img):
        img = img.astype(jnp.float32)            # per-slice cast (no wrapper copy)
        if rows_first:
            t = jnp.dot(wr, img, preferred_element_type=jnp.float32)
            return jnp.dot(t, wct, preferred_element_type=jnp.float32)
        t = jnp.dot(img, wct, preferred_element_type=jnp.float32)
        return jnp.dot(wr, t, preferred_element_type=jnp.float32)

    if tn == 1:
        out_ref[0] = one(img_ref[0]).astype(out_ref.dtype)
        return

    def body(i, carry):
        out_ref[i] = one(img_ref[i]).astype(out_ref.dtype)
        return carry

    lax.fori_loop(0, tn, body, 0)


def _resize_mask_kernel(img_ref, wr_ref, wct_ref, out_ref, mask_ref, *, threshold):
    # img_ref: [1, C, Hi, Wi]   wr_ref: [tile_Ho, Hi]   wct_ref: [Wi, Wo]
    # out_ref: [1, C, tile_Ho, Wo]   mask_ref: [1, 1, tile_Ho, Wo]
    # Row-tiled: this grid step produces one row stripe of the resized image
    # and the fused (channel-mean > threshold) mask for that stripe.
    c = img_ref.shape[1]
    wr = wr_ref[...]
    wct = wct_ref[...]
    acc = jnp.zeros(out_ref.shape[2:], jnp.float32)
    for ch in range(c):                          # C is tiny for thickness maps
        img = img_ref[0, ch].astype(jnp.float32)
        res = jnp.dot(jnp.dot(wr, img, preferred_element_type=jnp.float32),
                      wct, preferred_element_type=jnp.float32)
        stored = res.astype(out_ref.dtype)
        out_ref[0, ch] = stored
        # Threshold on the *stored* values so this path matches detect_mask exactly.
        acc = acc + stored.astype(jnp.float32)
    mask_ref[0, 0] = ((acc * (1.0 / c)) > threshold).astype(mask_ref.dtype)


def _mask_kernel(x_ref, out_ref, *, threshold):
    # x_ref: [1, C, tile_H, W] -> out_ref: [1, 1, tile_H, W]
    x = x_ref[0].astype(jnp.float32)
    m = jnp.mean(x, axis=0)
    out_ref[0, 0] = (m > threshold).astype(out_ref.dtype)


# ----------------------------------------------------------------------------
# Wrappers
# ----------------------------------------------------------------------------
def _resize_plan(hi, wi, out_h, out_w):
    wr = jnp.asarray(_bilinear_weight_matrix(out_h, hi))            # [Ho, Hi]
    wct = jnp.asarray(_bilinear_weight_matrix(out_w, wi).T.copy())  # [Wi, Wo]
    # Per-slice FLOP heuristic (only matters for the loop kernel).
    rows_first = out_h * wi * (hi + out_w) < hi * out_w * (wi + out_h)
    return wr, wct, rows_first


def bilinear_resize(x: jnp.ndarray, out_h: int, out_w: int) -> jnp.ndarray:
    """Bilinear resize of the last two dims of x (align_corners=False)."""
    *lead, hi, wi = x.shape
    n = int(np.prod(lead)) if lead else 1
    wr, wct, rows_first = _resize_plan(hi, wi, out_h, out_w)
    budget, limit = _vmem_budget()
    tn = _choose_tile_n(n, hi, wi, out_h, out_w, x.dtype.itemsize, budget)
    # Flat (single big matmul) path needs the flattened block's sublane dim
    # (tn*Hi) 8-aligned; otherwise fall back to the per-slice fori_loop kernel.
    use_flat = (hi % 8 == 0) and tn > 1
    grid = (pl.cdiv(n, tn),)

    out_shape = jax.ShapeDtypeStruct((n, out_h, out_w), x.dtype)
    out_spec = pl.BlockSpec((tn, out_h, out_w), lambda i: (i, 0, 0))
    wr_spec = pl.BlockSpec((out_h, hi), lambda i: (0, 0))
    wct_spec = pl.BlockSpec((wi, out_w), lambda i: (0, 0))
    cparams = pltpu.CompilerParams(dimension_semantics=("parallel",),
                                   vmem_limit_bytes=limit)

    if use_flat:
        xf = x.reshape(n * hi, wi)
        out = pl.pallas_call(
            partial(_resize_flat_kernel, tn=tn, hi=hi),
            out_shape=out_shape,
            grid=grid,
            in_specs=[pl.BlockSpec((tn * hi, wi), lambda i: (i, 0)),
                      wr_spec, wct_spec],
            out_specs=out_spec,
            scratch_shapes=[pltpu.VMEM((tn * hi, out_w), jnp.float32)],
            compiler_params=cparams,
        )(xf, wr, wct)
    else:
        xf = x.reshape(n, hi, wi)
        out = pl.pallas_call(
            partial(_resize_loop_kernel, tn=tn, rows_first=rows_first),
            out_shape=out_shape,
            grid=grid,
            in_specs=[pl.BlockSpec((tn, hi, wi), lambda i: (i, 0, 0)),
                      wr_spec, wct_spec],
            out_specs=out_spec,
            compiler_params=cparams,
        )(xf, wr, wct)
    # TODO(synk): optional bf16 matmul path for large downsampling inputs
    # (MXU-bound regime); kept f32 for exact parity with F.interpolate.
    return out.reshape(*lead, out_h, out_w)


def bilinear_resize_with_mask(x: jnp.ndarray, out_h: int, out_w: int,
                              threshold: float = _MASK_THRESHOLD):
    """Resize a [B, C, H, W] image and emit the (mean>threshold) mask in one pass.

    Tiled over (batch, output-row stripes) so the grid has >= 8 steps even for
    B == 1/2 (keeps both v7x TensorCores busy and pipelines the HBM writeback).
    """
    b, c, hi, wi = x.shape
    wr, wct, _ = _resize_plan(hi, wi, out_h, out_w)
    _, limit = _vmem_budget()
    th = _choose_row_tile(out_h, b)
    grid = (b, pl.cdiv(out_h, th))
    # TODO(synk): tile the input spatially too if thickness maps ever become
    # very large; today the whole (1, C, Hi, Wi) slice comfortably fits VMEM.
    resized, mask = pl.pallas_call(
        partial(_resize_mask_kernel, threshold=threshold),
        out_shape=(
            jax.ShapeDtypeStruct((b, c, out_h, out_w), x.dtype),
            jax.ShapeDtypeStruct((b, 1, out_h, out_w), jnp.float32),
        ),
        grid=grid,
        in_specs=[
            pl.BlockSpec((1, c, hi, wi), lambda bb, r: (bb, 0, 0, 0)),
            pl.BlockSpec((th, hi), lambda bb, r: (r, 0)),
            pl.BlockSpec((wi, out_w), lambda bb, r: (0, 0)),
        ],
        out_specs=(
            pl.BlockSpec((1, c, th, out_w), lambda bb, r: (bb, 0, r, 0)),
            pl.BlockSpec((1, 1, th, out_w), lambda bb, r: (bb, 0, r, 0)),
        ),
        compiler_params=pltpu.CompilerParams(
            dimension_semantics=("parallel", "parallel"),
            vmem_limit_bytes=limit),
    )(x, wr, wct)
    # TODO(synk): the mask could be emitted as uint8/bf16 to halve the HBM write;
    # kept float32 for exact parity with the PyTorch module's .float() mask.
    return resized, mask


def detect_mask_pallas(image: jnp.ndarray, threshold: float = _MASK_THRESHOLD) -> jnp.ndarray:
    b, c, h, w = image.shape
    _, limit = _vmem_budget()
    th = _choose_row_tile(h, b)
    grid = (b, pl.cdiv(h, th))
    return pl.pallas_call(
        partial(_mask_kernel, threshold=threshold),
        out_shape=jax.ShapeDtypeStruct((b, 1, h, w), jnp.float32),
        grid=grid,
        in_specs=[pl.BlockSpec((1, c, th, w), lambda bb, r: (bb, 0, r, 0))],
        out_specs=pl.BlockSpec((1, 1, th, w), lambda bb, r: (bb, 0, r, 0)),
        compiler_params=pltpu.CompilerParams(
            dimension_semantics=("parallel", "parallel"),
            vmem_limit_bytes=limit),
    )(image)


# ----------------------------------------------------------------------------
# Module
# ----------------------------------------------------------------------------
class SpatialRegistration:
    """JAX/Pallas port of the PyTorch SpatialRegistration module."""

    def __init__(self, analysis_dim=500, target_bands=30):
        self.analysis_dim = analysis_dim
        self.target_bands = target_bands
        self.selected_indices = None

    # --- mask detection (Pallas kernel) -----------------------------------
    def detect_mask(self, image: jnp.ndarray) -> jnp.ndarray:
        return detect_mask_pallas(image)

    # --- spectral band selection (glue: static gather along T) ------------
    def select_spectral_bands(self, hsi_img: jnp.ndarray) -> jnp.ndarray:
        B, C, T, H, W = hsi_img.shape
        if T == self.target_bands:
            self.selected_indices = list(range(T))
            return hsi_img
        if T <= self.target_bands:
            selected_indices = list(range(T))
        else:
            step = max(1, (T - 1) // (self.target_bands - 1))
            selected_indices = list(range(0, T, step))[: self.target_bands]
        if len(selected_indices) > self.target_bands:
            selected_indices = selected_indices[: self.target_bands]
        elif len(selected_indices) < self.target_bands:
            selected_indices.extend(
                [selected_indices[-1]] * (self.target_bands - len(selected_indices))
            )
        self.selected_indices = selected_indices
        idx = jnp.asarray(selected_indices, dtype=jnp.int32)
        return jnp.take(hsi_img, idx, axis=2)

    # --- forward -----------------------------------------------------------
    def forward(self, hsi_img: jnp.ndarray, aux_data: dict):
        B, C, T, H, W = hsi_img.shape
        if T == self.target_bands and H == self.analysis_dim and W == self.analysis_dim:
            self.selected_indices = list(range(T))
            hsi_registered = hsi_img
        else:
            if T != self.target_bands:
                hsi_img = self.select_spectral_bands(hsi_img)
                B, C, T, H, W = hsi_img.shape
            if H == self.analysis_dim and W == self.analysis_dim:
                hsi_registered = hsi_img
            else:
                # Equivalent to PyTorch: view(B*T,C,H,W) -> interpolate -> view back
                # (interpolation is independent per (b,c,t) HxW slice).
                hsi_registered = bilinear_resize(
                    hsi_img, self.analysis_dim, self.analysis_dim
                )

        aux_registered = {}
        thickness_mask = None
        for modality, data in aux_data.items():
            if data is not None:
                if data.shape[2] == self.analysis_dim and data.shape[3] == self.analysis_dim:
                    aux_registered[modality] = data
                elif modality == 'thickness':
                    # Fused resize + mask: one HBM write, no re-read of the result.
                    resized, thickness_mask = bilinear_resize_with_mask(
                        data, self.analysis_dim, self.analysis_dim
                    )
                    aux_registered[modality] = resized
                else:
                    aux_registered[modality] = bilinear_resize(
                        data, self.analysis_dim, self.analysis_dim
                    )
            else:
                aux_registered[modality] = None

        if ('thickness' in aux_registered
                and aux_registered['thickness'] is not None
                and thickness_mask is None):
            thickness_mask = self.detect_mask(aux_registered['thickness'])

        return hsi_registered, aux_registered, thickness_mask

    __call__ = forward


# ----------------------------------------------------------------------------
# Demo
# ----------------------------------------------------------------------------
if __name__ == "__main__":
    key = jax.random.PRNGKey(0)
    k1, k2, k3, k4, k5 = jax.random.split(key, 5)

    analysis_dim, target_bands = 32, 4
    B, C, T, H, W = 2, 1, 6, 16, 16

    hsi_img = jax.random.uniform(k1, (B, C, T, H, W), dtype=jnp.float32)
    aux_data = {
        # thickness: multi-channel, needs spatial resize, drives the fused mask path
        'thickness': jax.random.uniform(k2, (B, 2, 16, 16), dtype=jnp.float32),
        # another modality already at analysis_dim -> pass-through branch
        'fundus': jax.random.uniform(k3, (B, 3, analysis_dim, analysis_dim), dtype=jnp.float32),
        # None modality branch
        'oct': None,
    }

    module = SpatialRegistration(analysis_dim=analysis_dim, target_bands=target_bands)
    hsi_reg, aux_reg, mask = module(hsi_img, aux_data)

    jax.block_until_ready(hsi_reg)
    jax.block_until_ready(aux_reg['thickness'])
    jax.block_until_ready(aux_reg['fundus'])
    jax.block_until_ready(mask)

    # --- shape checks ------------------------------------------------------
    assert hsi_reg.shape == (B, C, target_bands, analysis_dim, analysis_dim)
    assert aux_reg['thickness'].shape == (B, 2, analysis_dim, analysis_dim)
    assert aux_reg['fundus'].shape == (B, 3, analysis_dim, analysis_dim)
    assert aux_reg['oct'] is None
    assert mask.shape == (B, 1, analysis_dim, analysis_dim)

    # --- numerical checks against a plain-jnp reference of the same math ---
    wr = jnp.asarray(_bilinear_weight_matrix(analysis_dim, H))
    wc = jnp.asarray(_bilinear_weight_matrix(analysis_dim, W))

    idx = jnp.asarray(module.selected_indices, dtype=jnp.int32)
    hsi_sel = jnp.take(hsi_img, idx, axis=2)
    ref_hsi = jnp.einsum('oh,nhw,wk->nok', wr, hsi_sel.reshape(-1, H, W), wc.T)
    ref_hsi = ref_hsi.reshape(B, C, target_bands, analysis_dim, analysis_dim)
    np.testing.assert_allclose(np.asarray(hsi_reg), np.asarray(ref_hsi),
                               atol=1e-4, rtol=1e-4)

    th = aux_data['thickness']
    ref_th = jnp.einsum('oh,nhw,wk->nok', wr, th.reshape(-1, 16, 16), wc.T)
    ref_th = ref_th.reshape(B, 2, analysis_dim, analysis_dim)
    np.testing.assert_allclose(np.asarray(aux_reg['thickness']), np.asarray(ref_th),
                               atol=1e-4, rtol=1e-4)

    mask_np = np.asarray(mask)
    assert set(np.unique(mask_np)).issubset({0.0, 1.0})
    # Fused mask must match the standalone detect_mask kernel on the same data.
    mask_standalone = module.detect_mask(aux_reg['thickness'])
    np.testing.assert_array_equal(np.asarray(mask_standalone), mask_np)

    # --- exercise the batched (flat single-matmul + fori_loop) path --------
    xb = jax.random.uniform(k4, (64, 16, 16), dtype=jnp.float32)
    yb = bilinear_resize(xb, 32, 32)
    ref_b = jnp.einsum('oh,nhw,wk->nok', wr, xb, wc.T)
    np.testing.assert_allclose(np.asarray(yb), np.asarray(ref_b), atol=1e-4, rtol=1e-4)

    # --- exercise the non-8-aligned fallback (per-slice fori_loop) path ----
    xo = jax.random.uniform(k5, (24, 12, 16), dtype=jnp.float32)
    yo = bilinear_resize(xo, 32, 32)
    wr_o = jnp.asarray(_bilinear_weight_matrix(32, 12))
    ref_o = jnp.einsum('oh,nhw,wk->nok', wr_o, xo, wc.T)
    np.testing.assert_allclose(np.asarray(yo), np.asarray(ref_o), atol=1e-4, rtol=1e-4)

    print("KERNEL_OK")
</pallas_src>

<mosaic_0001>
module attributes {stable_mosaic.version = 11 : i64} {
  func.func @_resize_loop_kernel(%arg0: i32, %arg1: memref<1x16x16xf32, #tpu.memory_space<vmem>>, %arg2: memref<32x16xf32, #tpu.memory_space<vmem>>, %arg3: memref<16x32xf32, #tpu.memory_space<vmem>>, %arg4: memref<1x32x32xf32, #tpu.memory_space<vmem>>) attributes {dimension_semantics = [#tpu.dimension_semantics<parallel>], iteration_bounds = array<i64: 8>, scalar_prefetch = 0 : i64, scratch_operands = 0 : i64, tpu.core_type = #tpu.core_type<tc>, window_params = [{transform_indices = @transform_0, window_bounds = array<i64: 1, 16, 16>}, {pipeline_mode = #tpu.pipeline_mode<synchronous>, transform_indices = @transform_1, window_bounds = array<i64: 32, 16>}, {pipeline_mode = #tpu.pipeline_mode<synchronous>, transform_indices = @transform_2, window_bounds = array<i64: 16, 32>}, {transform_indices = @transform_3, window_bounds = array<i64: 1, 32, 32>}]} {
    %c0 = arith.constant 0 : index
    %c0_0 = arith.constant 0 : index
    %0 = vector.load %arg2[%c0, %c0_0] : memref<32x16xf32, #tpu.memory_space<vmem>>, vector<32x16xf32>
    %c0_1 = arith.constant 0 : index
    %c0_2 = arith.constant 0 : index
    %1 = vector.load %arg3[%c0_1, %c0_2] : memref<16x32xf32, #tpu.memory_space<vmem>>, vector<16x32xf32>
    %c0_3 = arith.constant 0 : index
    %c0_4 = arith.constant 0 : index
    %c0_5 = arith.constant 0 : index
    %2 = vector.load %arg1[%c0_3, %c0_4, %c0_5] : memref<1x16x16xf32, #tpu.memory_space<vmem>>, vector<1x16x16xf32>
    %3 = vector.shape_cast %2 : vector<1x16x16xf32> to vector<16x16xf32>
    %cst = arith.constant dense<0.000000e+00> : vector<16x32xf32>
    %4 = tpu.matmul %3, %1, %cst {dimension_numbers = #tpu.dot_dimension_numbers<[1], [0], [0], [1], [0, 0, 1, 1], [], []>} : vector<16x16xf32>, vector<16x32xf32>, vector<16x32xf32> -> vector<16x32xf32>
    %cst_6 = arith.constant dense<0.000000e+00> : vector<32x32xf32>
    %5 = tpu.matmul %0, %4, %cst_6 {dimension_numbers = #tpu.dot_dimension_numbers<[1], [0], [0], [1], [0, 0, 1, 1], [], []>} : vector<32x16xf32>, vector<16x32xf32>, vector<32x32xf32> -> vector<32x32xf32>
    %c0_7 = arith.constant 0 : index
    %c0_8 = arith.constant 0 : index
    %c0_9 = arith.constant 0 : index
    %6 = vector.load %arg4[%c0_7, %c0_8, %c0_9] : memref<1x32x32xf32, #tpu.memory_space<vmem>>, vector<1x32x32xf32>
    %7 = vector.shape_cast %6 : vector<1x32x32xf32> to vector<32x32xf32>
    %8 = vector.shape_cast %5 : vector<32x32xf32> to vector<1x32x32xf32>
    tpu.vector_store %arg4[%c0_7, %c0_8, %c0_9], %8 {strides = array<i32>} : memref<1x32x32xf32, #tpu.memory_space<vmem>>, vector<1x32x32xf32>,
    return
  }
  func.func @transform_0(%arg0: i32) -> (i32, i32, i32) {
    %c0_i32 = arith.constant 0 : i32
    %c0_i32_0 = arith.constant 0 : i32
    %c0_i32_1 = arith.constant 0 : i32
    return %arg0, %c0_i32, %c0_i32_0 : i32, i32, i32
  }
  func.func @transform_1(%arg0: i32) -> (i32, i32) {
    %c0_i32 = arith.constant 0 : i32
    %c0_i32_0 = arith.constant 0 : i32
    %c0_i32_1 = arith.constant 0 : i32
    return %c0_i32, %c0_i32_0 : i32, i32
  }
  func.func @transform_2(%arg0: i32) -> (i32, i32) {
    %c0_i32 = arith.constant 0 : i32
    %c0_i32_0 = arith.constant 0 : i32
    %c0_i32_1 = arith.constant 0 : i32
    return %c0_i32, %c0_i32_0 : i32, i32
  }
  func.func @transform_3(%arg0: i32) -> (i32, i32, i32) {
    %c0_i32 = arith.constant 0 : i32
    %c0_i32_0 = arith.constant 0 : i32
    %c0_i32_1 = arith.constant 0 : i32
    return %arg0, %c0_i32, %c0_i32_0 : i32, i32, i32
  }
}

</mosaic_0001>

<llo_original>
// kernel: tpu_custom_call.1
$region0: #{tpu_custom_call.1}
  #allocation0 [shape = 'u32[]', space=smem, size = 0x4, offset = 0x4, fixed_abs, tag = 'smem constant byte address 0x4 - core index']
  #allocation1 [shape = 'u32[144,128]{1,0:T(1,128)}', space=vmem, size = 0x12000, scoped, tag = 'internal scratch']
  %s0 = inlined_call_operand.hbm [shape: f32[8,16,16], index: 0, kind: input, shape index: {}]
  %s1 = inlined_call_operand.vmem [shape: f32[32,16], index: 1, kind: input, shape index: {}]
  %s2 = inlined_call_operand.vmem [shape: f32[16,32], index: 2, kind: input, shape index: {}]
  %s3 = inlined_call_operand.hbm [shape: f32[8,32,32], index: 3, kind: output, shape index: {}]
  %s4 = sld [smem:[#allocation0]]
  $region49: #{tpu_custom_call.1} parent=0
    _
  %s6 = ssub.s32 1, %s4
  %s7 = scalar_select 0, %s6, %s4
  $region1: #{tpu_custom_call.1} parent=0
    #allocation2 [shape = 'u8[16384]{0}', space=vmem, size = 0x4000, scoped, tag = 'input window, operand 0']
    #allocation3 [shape = 's32[2]{0}', space=sflag, size = 0x8, scoped, tag = 'scoped memory for tpu_custom_call.1']
    #allocation4 [shape = 's32[2]{0}', space=sflag, size = 0x8, scoped, tag = 'scoped memory for tpu_custom_call.1']
    #allocation5 [shape = 'u8[32768]{0}', space=vmem, size = 0x8000, scoped, tag = 'output window, operand 0']
    %8 = vsyncpa [#allocation3], 0
    %s9 = scalar_lea.sflag [#allocation3], 1
    %10 = vsyncpa %s9, 0
    %11 = vsyncpa [#allocation4], 0
    %s12 = scalar_lea.sflag [#allocation4], 1
    %13 = vsyncpa %s12, 0
    loop: start=0, step=1, limit=10
    $region2: #{tpu_custom_call.1} parent=1 // loop_pre_header
      _
    $region3: #{tpu_custom_call.1} parent=1 // loop_header
      %s15 = sphi 0, %s19
      %p16 = scmp.ge.s32.totalorder %s15, 10
      %s25 = sphi 0, %s27
      %s28 = sphi 0, %s25
      %s29 = sphi 0, %s28
      %s45 = sphi 0, %s29
      %s49 = sphi 0, %s49
      %s51 = sphi 0, %s49
      %s52 = sphi 0, %s51
      %s66 = sphi 0, %s52
      %s70 = sphi 0, %s70
      %s72 = sphi 0, %s70
      %s73 = sphi 0, %s72
      %s87 = sphi 0, %s73
      %s93 = sphi 0, %s95
      %s96 = sphi 0, %s93
      %s97 = sphi 0, %s96
      %s113 = sphi 0, %s97
    $region4: #{tpu_custom_call.1} parent=1 // loop_header_branch
      %18 = sbr.rel (%p16) target = $region8
    $region5: #{tpu_custom_call.1} parent=1 // loop_body
      %s20 = ssub.s32 %s15, 1
      %s21 = ssub.s32 %s15, 2
      %s22 = sadd.s32 %s15, 1
      %s23 = ssub.s32 %s15, %s22
      %p24 = scmp.eq.s32.totalorder %s23, 0
      %s26 = sadd.s32 %s25, 1
      %s27 = scalar_select %p24, %s25, %s26
      %p30 = pneg %p24
      %p31 = scmp.eq.s32.totalorder %s15, 7
      %p32 = por %p30, %p31
      %p33 = scmp.ne.s32.totalorder %s25, %s28
      %p34 = scmp.eq.s32.totalorder %s15, 0
      %p35 = por %p33, %p34
      %p36 = scmp.ne.s32.totalorder %s25, %s28
      %p37 = scmp.eq.s32.totalorder %s20, 7
      %p38 = por %p36, %p37
      %p39 = scmp.ne.s32.totalorder %s28, %s29
      %p40 = scmp.eq.s32.totalorder %s20, 0
      %p41 = por %p39, %p40
      %p42 = scmp.ne.s32.totalorder %s28, %s29
      %p43 = scmp.eq.s32.totalorder %s21, 7
      %p44 = por %p42, %p43
      %p46 = scmp.ne.s32.totalorder %s29, %s45
      %p47 = scmp.eq.s32.totalorder %s21, 0
      %p48 = por %p46, %p47
      %s50 = sadd.s32 %s49, 1
      %p53 = scmp.eq.s32.totalorder %s15, 7
      %p54 = scmp.ne.s32.totalorder %s49, %s51
      %p55 = scmp.eq.s32.totalorder %s15, 0
      %p56 = por %p54, %p55
      %p57 = scmp.ne.s32.totalorder %s49, %s51
      %p58 = scmp.eq.s32.totalorder %s20, 7
      %p59 = por %p57, %p58
      %p60 = scmp.ne.s32.totalorder %s51, %s52
      %p61 = scmp.eq.s32.totalorder %s20, 0
      %p62 = por %p60, %p61
      %p63 = scmp.ne.s32.totalorder %s51, %s52
      %p64 = scmp.eq.s32.totalorder %s21, 7
      %p65 = por %p63, %p64
      %p67 = scmp.ne.s32.totalorder %s52, %s66
      %p68 = scmp.eq.s32.totalorder %s21, 0
      %p69 = por %p67, %p68
      %s71 = sadd.s32 %s70, 1
      %p74 = scmp.eq.s32.totalorder %s15, 7
      %p75 = scmp.ne.s32.totalorder %s70, %s72
      %p76 = scmp.eq.s32.totalorder %s15, 0
      %p77 = por %p75, %p76
      %p78 = scmp.ne.s32.totalorder %s70, %s72
      %p79 = scmp.eq.s32.totalorder %s20, 7
      %p80 = por %p78, %p79
      %p81 = scmp.ne.s32.totalorder %s72, %s73
      %p82 = scmp.eq.s32.totalorder %s20, 0
      %p83 = por %p81, %p82
      %p84 = scmp.ne.s32.totalorder %s72, %s73
      %p85 = scmp.eq.s32.totalorder %s21, 7
      %p86 = por %p84, %p85
      %p88 = scmp.ne.s32.totalorder %s73, %s87
      %p89 = scmp.eq.s32.totalorder %s21, 0
      %p90 = por %p88, %p89
      %s91 = ssub.s32 %s15, %s22
      %p92 = scmp.eq.s32.totalorder %s91, 0
      %s94 = sadd.s32 %s93, 1
      %s95 = scalar_select %p92, %s93, %s94
      %p98 = pneg %p92
      %p99 = scmp.eq.s32.totalorder %s15, 7
      %p100 = por %p98, %p99
      %p101 = scmp.ne.s32.totalorder %s93, %s96
      %p102 = scmp.eq.s32.totalorder %s15, 0
      %p103 = por %p101, %p102
      %p104 = scmp.ne.s32.totalorder %s93, %s96
      %p105 = scmp.eq.s32.totalorder %s20, 7
      %p106 = por %p104, %p105
      %p107 = scmp.ne.s32.totalorder %s96, %s97
      %p108 = scmp.eq.s32.totalorder %s20, 0
      %p109 = por %p107, %p108
      %p110 = scmp.ne.s32.totalorder %s96, %s97
      %p111 = scmp.eq.s32.totalorder %s21, 7
      %p112 = por %p110, %p111
      %p114 = scmp.ne.s32.totalorder %s97, %s113
      %p115 = scmp.eq.s32.totalorder %s21, 0
      %p116 = por %p114, %p115
      %p117 = scmp.le.s32.totalorder 1, %s15
      %p118 = scmp.lt.s32.totalorder %s15, 9
      %p119 = pnand %p117, %p118
      %p120 = pneg %p119
      // Predicated region
      $region9: #{tpu_custom_call.1} parent=5 // pred_check
        _
      $region10: #{tpu_custom_call.1} parent=5 // pred_check_branch
        %122 = sbr.rel (%p119) target = $region12
      $region11: #{tpu_custom_call.1} parent=5 // pred_region
        %s123 = ssub.s32 %s15, 1
        // Predicated region
        $region13: #{tpu_custom_call.1} parent=11 // pred_check
          %p124 = pneg %p62
        $region14: #{tpu_custom_call.1} parent=11 // pred_check_branch
          %126 = sbr.rel (%p124) target = $region16
        $region15: #{tpu_custom_call.1} parent=11 // pred_region
          _
        $region16: #{tpu_custom_call.1} parent=11 // pred_fallthru
          _
        // Predicated region
        $region17: #{tpu_custom_call.1} parent=11 // pred_check
          %p127 = pneg %p83
        $region18: #{tpu_custom_call.1} parent=11 // pred_check_branch
          %129 = sbr.rel (%p127) target = $region20
        $region19: #{tpu_custom_call.1} parent=11 // pred_region
          _
        $region20: #{tpu_custom_call.1} parent=11 // pred_fallthru
          _
      $region12: #{tpu_custom_call.1} parent=5 // pred_fallthru
        _
      %p130 = scmp.lt.s32.totalorder %s15, 8
      // Predicated region
      $region21: #{tpu_custom_call.1} parent=5 // pred_check
        %p131 = pneg %p130
      $region22: #{tpu_custom_call.1} parent=5 // pred_check_branch
        %133 = sbr.rel (%p131) target = $region24
      $region23: #{tpu_custom_call.1} parent=5 // pred_region
        // Predicated region
        $region25: #{tpu_custom_call.1} parent=23 // pred_check
          %p134 = pneg %p35
        $region26: #{tpu_custom_call.1} parent=23 // pred_check_branch
          %136 = sbr.rel (%p134) target = $region28
        $region27: #{tpu_custom_call.1} parent=23 // pred_region
          %s137 = sand.u32 %s25, 1
          %s138 = scalar_lea.sflag [#allocation3], %s137
          %s139 = sand.u32 %s25, 1
          %s140 = smul.addr %s139, 16
          %s141 = scalar_lea.vmem [#allocation2], %s140
          %s143 = ssub.s32 256, 256
          %144 = vsyncadd %s138, %s143
          %s145 = smul.addr %s15, 2
          %s146 = smul.addr %s145, 128
          %s147 = scalar_lea.hbm %s0, %s146
          %s148 = sshll.u32 %s141, 4
          %s149 = int_to_ptr.vmem [resolvable:$true] %s148
          %154 = dma.hbm_to_vmem [thread:$0]  %s147, 256, %s149, %s138, 128, 128, 8
        $region28: #{tpu_custom_call.1} parent=23 // pred_fallthru
          _
      $region24: #{tpu_custom_call.1} parent=5 // pred_fallthru
        _
      %p155 = scmp.le.s32.totalorder 1, %s15
      %p156 = scmp.lt.s32.totalorder %s15, 9
      %p157 = pnand %p155, %p156
      %p158 = pneg %p157
      // Predicated region
      $region29: #{tpu_custom_call.1} parent=5 // pred_check
        _
      $region30: #{tpu_custom_call.1} parent=5 // pred_check_branch
        %160 = sbr.rel (%p157) target = $region32
      $region31: #{tpu_custom_call.1} parent=5 // pred_region
        %s161 = ssub.s32 %s15, 1
        %s162 = sand.u32 %s28, 1
        %s163 = scalar_lea.sflag [#allocation3], %s162
        %s164 = sand.u32 %s28, 1
        %s165 = smul.addr %s164, 16
        %s166 = scalar_lea.vmem [#allocation2], %s165
        // Predicated region
        $region33: #{tpu_custom_call.1} parent=31 // pred_check
          %p167 = pneg %p41
        $region34: #{tpu_custom_call.1} parent=31 // pred_check_branch
          %169 = sbr.rel (%p167) target = $region36
        $region35: #{tpu_custom_call.1} parent=31 // pred_region
          %170 = dma.done %s163, 256
        $region36: #{tpu_custom_call.1} parent=31 // pred_fallthru
          _
        %s171 = sand.u32 %s28, 1
        %s172 = scalar_lea.sflag [#allocation3], %s171
        %s173 = sand.u32 %s28, 1
        %s174 = smul.addr %s173, 16
        %s175 = scalar_lea.vmem [#allocation2], %s174
        %p176 = pneg %p41
        %p177 = pneg %p38
        %p178 = pneg %p62
        %p179 = pneg %p59
        %p180 = pneg %p83
        %p181 = pneg %p80
        %p182 = pneg %p109
        %p183 = pneg %p106
        %s184 = sand.u32 %s96, 1
        %s185 = scalar_lea.sflag [#allocation4], %s184
        %s186 = sand.u32 %s96, 1
        %s187 = smul.addr %s186, 32
        %s188 = scalar_lea.vmem [#allocation5], %s187
        %v189 = vld [vmem:[%s1] sm:$0xff]
        %v190 = vld [vmem:[%s1 + $0x8] sm:$0xff]
        %v191 = vld [vmem:[%s1 + $0x10] sm:$0xff]
        %v192 = vld [vmem:[%s1 + $0x18] sm:$0xff]
        %v193 = vld [vmem:[%s2] sm:$0xff]
        %v194 = vld [vmem:[%s2 + $0x8] sm:$0xff]
        %v195 = vld [vmem:[%s166] sm:$0xff]
        %v196 = vld [vmem:[%s166 + $0x8] sm:$0xff]
        %vm197 = vcmask 130048
        %v199 = vsel %vm197, %v195, 0
        %v202 = vsel %vm197, %v196, 0
        %204 = vmatprep.subr.mxu0 0.0
        %205 = vmatpush1.msra.mxu0 %v193
        %206 = vmatprep.subr.mxu0 0.0
        %207 = vmatpush1.msra.mxu0 %v194
        %208 = vmatprep.subr.mxu0 0.0
        %209 = vmatpush1.msra.mxu0 0.0
        %210 = vmatprep.subr.mxu0 0.0
        %211 = vmatpush1.msra.mxu0 0.0
        %212 = vmatprep.subr.mxu0 0.0
        %213 = vmatpush1.msra.mxu0 0.0
        %214 = vmatprep.subr.mxu0 0.0
        %215 = vmatpush1.msra.mxu0 0.0
        %216 = vmatprep.subr.mxu0 0.0
        %217 = vmatpush1.msra.mxu0 0.0
        %218 = vmatprep.subr.mxu0 0.0
        %219 = vmatpush1.msra.mxu0 0.0
        %220 = vmatprep.subr.mxu0 0.0
        %221 = vmatpush1.msra.mxu0 0.0
        %222 = vmatprep.subr.mxu0 0.0
        %223 = vmatpush1.msra.mxu0 0.0
        %224 = vmatprep.subr.mxu0 0.0
        %225 = vmatpush1.msra.mxu0 0.0
        %226 = vmatprep.subr.mxu0 0.0
        %227 = vmatpush1.msra.mxu0 0.0
        %228 = vmatprep.subr.mxu0 0.0
        %229 = vmatpush1.msra.mxu0 0.0
        %230 = vmatprep.subr.mxu0 0.0
        %231 = vmatpush1.msra.mxu0 0.0
        %232 = vmatprep.subr.mxu0 0.0
        %233 = vmatpush1.msra.mxu0 0.0
        %234 = vmatprep.subr.mxu0 0.0
        %235 = vmatpush1.msra.mxu0 0.0
        %236 = vmatprep.subr.mxu0 0.0
        %237 = vmatpush1.msra.mxu0 0.0
        %238 = vmatprep.subr.mxu0 0.0
        %239 = vmatpush1.msra.mxu0 0.0
        %240 = vmatprep.subr.mxu0 0.0
        %241 = vmatpush1.msra.mxu0 0.0
        %242 = vmatprep.subr.mxu0 0.0
        %243 = vmatpush1.msra.mxu0 0.0
        %244 = vmatprep.subr.mxu0 0.0
        %245 = vmatpush1.msra.mxu0 0.0
        %246 = vmatprep.subr.mxu0 0.0
        %247 = vmatpush1.msra.mxu0 0.0
        %248 = vmatprep.subr.mxu0 0.0
        %249 = vmatpush1.msra.mxu0 0.0
        %250 = vmatprep.subr.mxu0 0.0
        %251 = vmatpush1.msra.mxu0 0.0
        %252 = vmatprep.subr.mxu0 0.0
        %253 = vmatpush1.msra.mxu0 0.0
        %254 = vmatprep.subr.mxu0 0.0
        %255 = vmatpush1.msra.mxu0 0.0
        %256 = vmatprep.subr.mxu0 0.0
        %257 = vmatpush1.msra.mxu0 0.0
        %258 = vmatprep.subr.mxu0 0.0
        %259 = vmatpush1.msra.mxu0 0.0
        %260 = vmatprep.subr.mxu0 0.0
        %261 = vmatpush1.msra.mxu0 0.0
        %262 = vmatprep.subr.mxu0 0.0
        %263 = vmatpush1.msra.mxu0 0.0
        %264 = vmatprep.subr.mxu0 0.0
        %265 = vmatpush1.msra.mxu0 0.0
        %266 = vmatprep.subr.mxu0 0.0
        %267 = vmatpush1.msra.mxu0 0.0
        %268 = vmatprep.mubr.f32.mxu0 0.0
        %269 = vmatmul.mubr.f32.gmra.mrb[0].mxu0 %v199
        %v270 = vpop.f32.mrb[0].mxu0
        %v271 = vadd.f32 0.0, %v270
        %v272 = vpop.f32.mrb[0].mxu0
        %273 = vmatprep.mubr.f32.mxu0 0.0
        %274 = vmatmul.mubr.f32.gmra.mrb[0].mxu0 %v202
        %v275 = vpop.f32.mrb[0].mxu0
        %v276 = vadd.f32 0.0, %v275
        %v277 = vpop.f32.mrb[0].mxu0
        %278 = vdwg.mxu0
        %v280 = vsel %vm197, %v189, 0
        %v283 = vsel %vm197, %v190, 0
        %v286 = vsel %vm197, %v191, 0
        %v289 = vsel %vm197, %v192, 0
        %291 = vmatprep.subr.mxu0 0.0
        %292 = vmatpush1.msra.mxu0 %v271
        %293 = vmatprep.subr.mxu0 0.0
        %294 = vmatpush1.msra.mxu0 %v276
        %295 = vmatprep.subr.mxu0 0.0
        %296 = vmatpush1.msra.mxu0 0.0
        %297 = vmatprep.subr.mxu0 0.0
        %298 = vmatpush1.msra.mxu0 0.0
        %299 = vmatprep.subr.mxu0 0.0
        %300 = vmatpush1.msra.mxu0 0.0
        %301 = vmatprep.subr.mxu0 0.0
        %302 = vmatpush1.msra.mxu0 0.0
        %303 = vmatprep.subr.mxu0 0.0
        %304 = vmatpush1.msra.mxu0 0.0
        %305 = vmatprep.subr.mxu0 0.0
        %306 = vmatpush1.msra.mxu0 0.0
        %307 = vmatprep.subr.mxu0 0.0
        %308 = vmatpush1.msra.mxu0 0.0
        %309 = vmatprep.subr.mxu0 0.0
        %310 = vmatpush1.msra.mxu0 0.0
        %311 = vmatprep.subr.mxu0 0.0
        %312 = vmatpush1.msra.mxu0 0.0
        %313 = vmatprep.subr.mxu0 0.0
        %314 = vmatpush1.msra.mxu0 0.0
        %315 = vmatprep.subr.mxu0 0.0
        %316 = vmatpush1.msra.mxu0 0.0
        %317 = vmatprep.subr.mxu0 0.0
        %318 = vmatpush1.msra.mxu0 0.0
        %319 = vmatprep.subr.mxu0 0.0
        %320 = vmatpush1.msra.mxu0 0.0
        %321 = vmatprep.subr.mxu0 0.0
        %322 = vmatpush1.msra.mxu0 0.0
        %323 = vmatprep.subr.mxu0 0.0
        %324 = vmatpush1.msra.mxu0 0.0
        %325 = vmatprep.subr.mxu0 0.0
        %326 = vmatpush1.msra.mxu0 0.0
        %327 = vmatprep.subr.mxu0 0.0
        %328 = vmatpush1.msra.mxu0 0.0
        %329 = vmatprep.subr.mxu0 0.0
        %330 = vmatpush1.msra.mxu0 0.0
        %331 = vmatprep.subr.mxu0 0.0
        %332 = vmatpush1.msra.mxu0 0.0
        %333 = vmatprep.subr.mxu0 0.0
        %334 = vmatpush1.msra.mxu0 0.0
        %335 = vmatprep.subr.mxu0 0.0
        %336 = vmatpush1.msra.mxu0 0.0
        %337 = vmatprep.subr.mxu0 0.0
        %338 = vmatpush1.msra.mxu0 0.0
        %339 = vmatprep.subr.mxu0 0.0
        %340 = vmatpush1.msra.mxu0 0.0
        %341 = vmatprep.subr.mxu0 0.0
        %342 = vmatpush1.msra.mxu0 0.0
        %343 = vmatprep.subr.mxu0 0.0
        %344 = vmatpush1.msra.mxu0 0.0
        %345 = vmatprep.subr.mxu0 0.0
        %346 = vmatpush1.msra.mxu0 0.0
        %347 = vmatprep.subr.mxu0 0.0
        %348 = vmatpush1.msra.mxu0 0.0
        %349 = vmatprep.subr.mxu0 0.0
        %350 = vmatpush1.msra.mxu0 0.0
        %351 = vmatprep.subr.mxu0 0.0
        %352 = vmatpush1.msra.mxu0 0.0
        %353 = vmatprep.subr.mxu0 0.0
        %354 = vmatpush1.msra.mxu0 0.0
        %355 = vmatprep.mubr.f32.mxu0 0.0
        %356 = vmatmul.mubr.f32.gmra.mrb[0].mxu0 %v280
        %v357 = vpop.f32.mrb[0].mxu0
        %v358 = vadd.f32 0.0, %v357
        %v359 = vpop.f32.mrb[0].mxu0
        %360 = vmatprep.mubr.f32.mxu0 0.0
        %361 = vmatmul.mubr.f32.gmra.mrb[0].mxu0 %v283
        %v362 = vpop.f32.mrb[0].mxu0
        %v363 = vadd.f32 0.0, %v362
        %v364 = vpop.f32.mrb[0].mxu0
        %365 = vmatprep.mubr.f32.mxu0 0.0
        %366 = vmatmul.mubr.f32.gmra.mrb[0].mxu0 %v286
        %v367 = vpop.f32.mrb[0].mxu0
        %v368 = vadd.f32 0.0, %v367
        %v369 = vpop.f32.mrb[0].mxu0
        %370 = vmatprep.mubr.f32.mxu0 0.0
        %371 = vmatmul.mubr.f32.gmra.mrb[0].mxu0 %v289
        %v372 = vpop.f32.mrb[0].mxu0
        %v373 = vadd.f32 0.0, %v372
        %v374 = vpop.f32.mrb[0].mxu0
        %375 = vdwg.mxu0
        %vm376 = vcmask 261120
        %377 = vst.msk [vmem:[%s188] sm:$0xff] %vm376, %v358
        %378 = vst.msk [vmem:[%s188 + $0x8] sm:$0xff] %vm376, %v363
        %379 = vst.msk [vmem:[%s188 + $0x10] sm:$0xff] %vm376, %v368
        %380 = vst.msk [vmem:[%s188 + $0x18] sm:$0xff] %vm376, %v373
        %s381 = sand.u32 %s96, 1
        %s382 = scalar_lea.sflag [#allocation4], %s381
        %s383 = sand.u32 %s96, 1
        %s384 = smul.addr %s383, 32
        %s385 = scalar_lea.vmem [#allocation5], %s384
        // Predicated region
        $region37: #{tpu_custom_call.1} parent=31 // pred_check
          %p386 = pneg %p106
        $region38: #{tpu_custom_call.1} parent=31 // pred_check_branch
          %388 = sbr.rel (%p386) target = $region40
        $region39: #{tpu_custom_call.1} parent=31 // pred_region
          %s390 = ssub.s32 512, 512
          %391 = vsyncadd %s382, %s390
          %s392 = smul.addr %s20, 4
          %s393 = smul.addr %s392, 128
          %s394 = scalar_lea.hbm %s3, %s393
          %s395 = sshll.u32 %s385, 4
          %s396 = int_to_ptr.vmem [resolvable:$true] %s395
          %401 = dma.vmem_to_hbm [thread:$0]  %s396, 512, %s394, %s382, 128, 128, 8
        $region40: #{tpu_custom_call.1} parent=31 // pred_fallthru
          _
      $region32: #{tpu_custom_call.1} parent=5 // pred_fallthru
        _
      %p402 = scmp.le.s32.totalorder 2, %s15
      // Predicated region
      $region41: #{tpu_custom_call.1} parent=5 // pred_check
        %p403 = pneg %p402
      $region42: #{tpu_custom_call.1} parent=5 // pred_check_branch
        %405 = sbr.rel (%p403) target = $region44
      $region43: #{tpu_custom_call.1} parent=5 // pred_region
        %s406 = ssub.s32 %s15, 2
        // Predicated region
        $region45: #{tpu_custom_call.1} parent=43 // pred_check
          %p407 = pneg %p112
        $region46: #{tpu_custom_call.1} parent=43 // pred_check_branch
          %409 = sbr.rel (%p407) target = $region48
        $region47: #{tpu_custom_call.1} parent=43 // pred_region
          %s410 = sand.u32 %s97, 1
          %s411 = scalar_lea.sflag [#allocation4], %s410
          %s412 = sand.u32 %s97, 1
          %s413 = smul.addr %s412, 32
          %s414 = scalar_lea.vmem [#allocation5], %s413
          %415 = dma.done %s411, 512
        $region48: #{tpu_custom_call.1} parent=43 // pred_fallthru
          _
      $region44: #{tpu_custom_call.1} parent=5 // pred_fallthru
        _
    $region6: #{tpu_custom_call.1} parent=1 // loop_footer
      %s19 = sadd.s32 1, %s15
    $region7: #{tpu_custom_call.1} parent=1 // loop_footer_branch
      %14 = sbr.rel target = $region3
    $region8: #{tpu_custom_call.1} parent=1 // loop_exit
      _
    %416 = vsyncpa [#allocation3], 1
    %s417 = scalar_lea.sflag [#allocation3], 1
    %418 = vsyncpa %s417, 1
    %419 = vsyncpa [#allocation4], 1
    %s420 = scalar_lea.sflag [#allocation4], 1
    %421 = vsyncpa %s420, 1

</llo_original>
